<compile_context>
chip_gen: v6e
topology: v6e:2x2x1
jax: 0.10.0
libtpu: 0.0.40
codegen_flags: <defaults>
</compile_context>

<pallas_src>
import numpy as np
import jax
import jax.numpy as jnp
from jax.experimental import pallas as pl
from jax.experimental.pallas import tpu as pltpu


# ------------------------- model config (small, deterministic) -------------------------
SIGNAL_WINDOW_SIZE = 16
TIME_SLICE_INTERVAL = 1          # mf_time_slice_interval
MAXPOOL_SIZE = 2                 # mf_maxpool_size in {1,2,4}
SUBWINDOW_SIZE = 8               # power of 2, <= time_points
FFT_NBINS = 2                    # power of 2
NUM_FILTERS = 8                  # fft_num_filters
NEG_SLOPE = 0.02                 # mf_negative_slope
# mf_dropout_rate: Dropout3d is identity in eval mode

TIME_POINTS = SIGNAL_WINDOW_SIZE // TIME_SLICE_INTERVAL
SUBWINDOW_NBINS = TIME_POINTS // SUBWINDOW_SIZE
NFFT = SUBWINDOW_SIZE // FFT_NBINS
NFREQS = NFFT // 2 + 1
HP = 8 // MAXPOOL_SIZE
WP = 8 // MAXPOOL_SIZE
S = HP * WP                                        # pooled spatial lanes per time point

D_IN = TIME_POINTS * S                             # 256 : flattened (time, spatial) lanes
R_DFT = SUBWINDOW_NBINS * FFT_NBINS * NFREQS * S   # 192 : (sw, bin, freq, spatial) columns
F_OUT = SUBWINDOW_NBINS * NUM_FILTERS              # 16  : flattened (sw, filter) output


def _round_up(a, b):
    return (a + b - 1) // b * b


# --------------------------------- Pallas kernel ---------------------------------------
def fft_feature_kernel(x_ref, bc_ref, bs_ref, w_ref, b_ref, o_ref):
    """One batch tile of the full FFT-feature pipeline.

    x_ref  : (N_TILE, D_IN)    pooled signal, (time, spatial) flattened on lanes
    bc_ref : (D_IN, R_DFT)     block-structured rfft cosine basis
    bs_ref : (D_IN, R_DFT)     block-structured rfft sine basis
    w_ref  : (R_DFT, F_OUT)    Conv3d weights, block-diag over sub-windows, /fft_nbins folded in
    b_ref  : (1, F_OUT)        Conv3d biases (sw-major, filter-minor)
    o_ref  : (N_TILE, F_OUT)   LeakyReLU'd features, already in torch.flatten order
    """
    x = x_ref[...]                                                   # (N, D_IN) f32

    # Explicit rfft as two lane-axis MXU matmuls (all sub-windows / bins / freqs at once).
    re = jnp.dot(x, bc_ref[...], preferred_element_type=jnp.float32)  # (N, R_DFT)
    im = jnp.dot(x, bs_ref[...], preferred_element_type=jnp.float32)  # (N, R_DFT)
    amp = jnp.sqrt(re * re + im * im)                                  # |rfft|

    # Conv3d (full receptive field) + bin-mean, fused into one matmul; then bias + LeakyReLU.
    out = jnp.dot(amp, w_ref[...], preferred_element_type=jnp.float32) + b_ref[...]
    out = jnp.where(out >= 0, out, NEG_SLOPE * out)                    # Dropout3d == identity (eval)
    o_ref[...] = out.astype(o_ref.dtype)


# ----------------------------- static DFT basis (host side) -----------------------------
def _build_dft_bases():
    b_cos = np.zeros((D_IN, R_DFT), dtype=np.float32)
    b_sin = np.zeros((D_IN, R_DFT), dtype=np.float32)
    for sw in range(SUBWINDOW_NBINS):
        for ib in range(FFT_NBINS):
            for k in range(NFREQS):
                col0 = ((sw * FFT_NBINS + ib) * NFREQS + k) * S
                for tl in range(NFFT):
                    t = sw * SUBWINDOW_SIZE + ib * NFFT + tl
                    ang = 2.0 * np.pi * k * tl / NFFT
                    row0 = t * S
                    for s in range(S):
                        b_cos[row0 + s, col0 + s] = np.cos(ang)
                        b_sin[row0 + s, col0 + s] = np.sin(ang)   # sign-free: only |.| is used
    return jnp.asarray(b_cos), jnp.asarray(b_sin)


_B_COS, _B_SIN = _build_dft_bases()


# ----------------------------------- wrapper --------------------------------------------
def fft_feature_forward(x, conv_weight, conv_bias):
    """x: (N, 1, SIGNAL_WINDOW_SIZE, 8, 8) float32
       conv_weight: (SUBWINDOW_NBINS, F, 1, NFREQS, HP, WP)
       conv_bias:   (SUBWINDOW_NBINS, F)
       returns: (N, SUBWINDOW_NBINS * F)  == torch.flatten(relu(dropout(fft_features)), 1)
    """
    n = x.shape[0]

    # --- glue: time slicing + spatial max-pool (MaxPool3d kernel (1, mp, mp)) ---
    xs = x[:, 0, ::TIME_SLICE_INTERVAL, :, :]                          # (N, T, 8, 8)
    if MAXPOOL_SIZE > 1:
        xs = xs.reshape(n, TIME_POINTS, HP, MAXPOOL_SIZE, WP, MAXPOOL_SIZE)
        xs = jnp.max(xs, axis=(3, 5))                                  # (N, T, HP, WP)
    x_flat = xs.reshape(n, D_IN).astype(jnp.float32)                   # (N, T*S) lanes

    # --- glue: conv weights -> block-diagonal (R_DFT, F_OUT), bias -> (1, F_OUT) ---
    w = conv_weight[:, :, 0].reshape(SUBWINDOW_NBINS, NUM_FILTERS, NFREQS * S)
    w_t = jnp.transpose(w, (0, 2, 1)).astype(jnp.float32) / float(FFT_NBINS)   # (sw, K*S, F)
    eye = jnp.eye(SUBWINDOW_NBINS, dtype=jnp.float32)
    # w_big[sw, bin, ks, sw2, f] = eye[sw, sw2] * w_t[sw, ks, f]   (same weight for every bin)
    w_big = eye[:, None, None, :, None] * w_t[:, None, :, None, :]     # (sw, 1, K*S, sw, F)
    w_big = jnp.broadcast_to(
        w_big, (SUBWINDOW_NBINS, FFT_NBINS, NFREQS * S, SUBWINDOW_NBINS, NUM_FILTERS))
    w_big = w_big.reshape(R_DFT, F_OUT)
    b_big = conv_bias.reshape(1, F_OUT).astype(jnp.float32)

    # --- batch tiling (grid only over N; sub-window axis folded into the body) ---
    n_tile = min(512, _round_up(n, 8))
    n_pad = _round_up(n, n_tile)
    if n_pad != n:
        x_flat = jnp.pad(x_flat, ((0, n_pad - n), (0, 0)))

    out = pl.pallas_call(
        fft_feature_kernel,
        out_shape=jax.ShapeDtypeStruct((n_pad, F_OUT), x.dtype),
        grid_spec=pltpu.PrefetchScalarGridSpec(
            num_scalar_prefetch=0,
            grid=(n_pad // n_tile,),
            in_specs=[
                pl.BlockSpec((n_tile, D_IN), lambda i: (i, 0)),
                pl.BlockSpec((D_IN, R_DFT), lambda i: (0, 0)),
                pl.BlockSpec((D_IN, R_DFT), lambda i: (0, 0)),
                pl.BlockSpec((R_DFT, F_OUT), lambda i: (0, 0)),
                pl.BlockSpec((1, F_OUT), lambda i: (0, 0)),
            ],
            out_specs=pl.BlockSpec((n_tile, F_OUT), lambda i: (i, 0)),
        ),
        compiler_params=pltpu.CompilerParams(dimension_semantics=("parallel",)),
    )(x_flat, _B_COS, _B_SIN, w_big, b_big)

    return out[:n]                                                     # already (N, nbins*F)


# ------------------------------ pure-JAX reference --------------------------------------
def reference_forward(x, conv_weight, conv_bias):
    n = x.shape[0]
    xs = x[:, 0, ::TIME_SLICE_INTERVAL, :, :]
    if MAXPOOL_SIZE > 1:
        xs = xs.reshape(n, TIME_POINTS, HP, MAXPOOL_SIZE, WP, MAXPOOL_SIZE).max(axis=(3, 5))
    feats = []
    for i_sw in range(SUBWINDOW_NBINS):
        x_sw = xs[:, i_sw * SUBWINDOW_SIZE:(i_sw + 1) * SUBWINDOW_SIZE]        # (N, sub, HP, WP)
        amps = []
        for ib in range(FFT_NBINS):
            chunk = x_sw[:, ib * NFFT:(ib + 1) * NFFT]
            amps.append(jnp.abs(jnp.fft.rfft(chunk, axis=1)))                  # (N, NFREQS, HP, WP)
        mean_amp = jnp.mean(jnp.stack(amps, axis=1), axis=1)
        w = conv_weight[i_sw, :, 0]                                            # (F, NFREQS, HP, WP)
        o = jnp.einsum('nkhw,fkhw->nf', mean_amp, w) + conv_bias[i_sw]
        o = jnp.where(o >= 0, o, NEG_SLOPE * o)
        feats.append(o)
    return jnp.stack(feats, axis=1).reshape(n, SUBWINDOW_NBINS * NUM_FILTERS)


# ------------------------------------- main ----------------------------------------------
if __name__ == "__main__":
    key = jax.random.PRNGKey(0)
    kx, kw, kb = jax.random.split(key, 3)

    N = 2
    x = jax.random.normal(kx, (N, 1, SIGNAL_WINDOW_SIZE, 8, 8), dtype=jnp.float32)

    # Deterministic synthetic Conv3d parameters (one conv per sub-window).
    fan_in = 1 * NFREQS * HP * WP
    bound = 1.0 / np.sqrt(fan_in)
    conv_weight = jax.random.uniform(
        kw, (SUBWINDOW_NBINS, NUM_FILTERS, 1, NFREQS, HP, WP),
        minval=-bound, maxval=bound, dtype=jnp.float32)
    conv_bias = jax.random.uniform(
        kb, (SUBWINDOW_NBINS, NUM_FILTERS),
        minval=-bound, maxval=bound, dtype=jnp.float32)

    out = fft_feature_forward(x, conv_weight, conv_bias)
    out = jax.block_until_ready(out)

    ref = jax.block_until_ready(reference_forward(x, conv_weight, conv_bias))
    np.testing.assert_allclose(np.asarray(out), np.asarray(ref), rtol=1e-3, atol=1e-3)

    assert out.shape == (N, SUBWINDOW_NBINS * NUM_FILTERS)
    print("KERNEL_OK")
</pallas_src>

<mosaic_0001>
module attributes {stable_mosaic.version = 11 : i64} {
  func.func @fft_feature_kernel(%arg0: i32, %arg1: memref<8x256xf32, #tpu.memory_space<vmem>>, %arg2: memref<256x192xf32, #tpu.memory_space<vmem>>, %arg3: memref<256x192xf32, #tpu.memory_space<vmem>>, %arg4: memref<192x16xf32, #tpu.memory_space<vmem>>, %arg5: memref<1x16xf32, #tpu.memory_space<vmem>>, %arg6: memref<8x16xf32, #tpu.memory_space<vmem>>) attributes {dimension_semantics = [#tpu.dimension_semantics<parallel>], iteration_bounds = array<i64: 1>, scalar_prefetch = 0 : i64, scratch_operands = 0 : i64, tpu.core_type = #tpu.core_type<tc>, window_params = [{transform_indices = @transform_0, window_bounds = array<i64: 8, 256>}, {pipeline_mode = #tpu.pipeline_mode<synchronous>, transform_indices = @transform_1, window_bounds = array<i64: 256, 192>}, {pipeline_mode = #tpu.pipeline_mode<synchronous>, transform_indices = @transform_2, window_bounds = array<i64: 256, 192>}, {pipeline_mode = #tpu.pipeline_mode<synchronous>, transform_indices = @transform_3, window_bounds = array<i64: 192, 16>}, {pipeline_mode = #tpu.pipeline_mode<synchronous>, transform_indices = @transform_4, window_bounds = array<i64: 1, 16>}, {transform_indices = @transform_5, window_bounds = array<i64: 8, 16>}]} {
    %c0 = arith.constant 0 : index
    %c0_0 = arith.constant 0 : index
    %0 = vector.load %arg1[%c0, %c0_0] : memref<8x256xf32, #tpu.memory_space<vmem>>, vector<8x256xf32>
    %c0_1 = arith.constant 0 : index
    %c0_2 = arith.constant 0 : index
    %1 = vector.load %arg2[%c0_1, %c0_2] : memref<256x192xf32, #tpu.memory_space<vmem>>, vector<256x192xf32>
    %cst = arith.constant dense<0.000000e+00> : vector<8x192xf32>
    %2 = tpu.matmul %0, %1, %cst {dimension_numbers = #tpu.dot_dimension_numbers<[1], [0], [0], [1], [0, 0, 1, 1], [], []>} : vector<8x256xf32>, vector<256x192xf32>, vector<8x192xf32> -> vector<8x192xf32>
    %c0_3 = arith.constant 0 : index
    %c0_4 = arith.constant 0 : index
    %3 = vector.load %arg3[%c0_3, %c0_4] : memref<256x192xf32, #tpu.memory_space<vmem>>, vector<256x192xf32>
    %cst_5 = arith.constant dense<0.000000e+00> : vector<8x192xf32>
    %4 = tpu.matmul %0, %3, %cst_5 {dimension_numbers = #tpu.dot_dimension_numbers<[1], [0], [0], [1], [0, 0, 1, 1], [], []>} : vector<8x256xf32>, vector<256x192xf32>, vector<8x192xf32> -> vector<8x192xf32>
    %5 = arith.mulf %2, %2 : vector<8x192xf32>
    %6 = arith.mulf %4, %4 : vector<8x192xf32>
    %7 = arith.addf %5, %6 : vector<8x192xf32>
    %8 = math.sqrt %7 : vector<8x192xf32>
    %c0_6 = arith.constant 0 : index
    %c0_7 = arith.constant 0 : index
    %9 = vector.load %arg4[%c0_6, %c0_7] : memref<192x16xf32, #tpu.memory_space<vmem>>, vector<192x16xf32>
    %cst_8 = arith.constant dense<0.000000e+00> : vector<8x16xf32>
    %10 = tpu.matmul %8, %9, %cst_8 {dimension_numbers = #tpu.dot_dimension_numbers<[1], [0], [0], [1], [0, 0, 1, 1], [], []>} : vector<8x192xf32>, vector<192x16xf32>, vector<8x16xf32> -> vector<8x16xf32>
    %c0_9 = arith.constant 0 : index
    %c0_10 = arith.constant 0 : index
    %11 = vector.load %arg5[%c0_9, %c0_10] : memref<1x16xf32, #tpu.memory_space<vmem>>, vector<1x16xf32>
    %12 = vector.broadcast %11 : vector<1x16xf32> to vector<8x16xf32>
    %13 = arith.addf %10, %12 : vector<8x16xf32>
    %cst_11 = arith.constant 0.000000e+00 : f32
    %14 = vector.broadcast %cst_11 : f32 to vector<8x16xf32>
    %15 = arith.cmpf oge, %13, %14 : vector<8x16xf32>
    %cst_12 = arith.constant 2.000000e-02 : f32
    %16 = vector.broadcast %cst_12 : f32 to vector<8x16xf32>
    %17 = arith.mulf %16, %13 : vector<8x16xf32>
    %18 = arith.select %15, %13, %17 : vector<8x16xi1>, vector<8x16xf32>
    %c0_13 = arith.constant 0 : index
    %c0_14 = arith.constant 0 : index
    %19 = vector.load %arg6[%c0_13, %c0_14] : memref<8x16xf32, #tpu.memory_space<vmem>>, vector<8x16xf32>
    tpu.vector_store %arg6[%c0_13, %c0_14], %18 {strides = array<i32>} : memref<8x16xf32, #tpu.memory_space<vmem>>, vector<8x16xf32>,
    return
  }
  func.func @transform_0(%arg0: i32) -> (i32, i32) {
    %c0_i32 = arith.constant 0 : i32
    %c0_i32_0 = arith.constant 0 : i32
    return %arg0, %c0_i32 : i32, i32
  }
  func.func @transform_1(%arg0: i32) -> (i32, i32) {
    %c0_i32 = arith.constant 0 : i32
    %c0_i32_0 = arith.constant 0 : i32
    %c0_i32_1 = arith.constant 0 : i32
    return %c0_i32, %c0_i32_0 : i32, i32
  }
  func.func @transform_2(%arg0: i32) -> (i32, i32) {
    %c0_i32 = arith.constant 0 : i32
    %c0_i32_0 = arith.constant 0 : i32
    %c0_i32_1 = arith.constant 0 : i32
    return %c0_i32, %c0_i32_0 : i32, i32
  }
  func.func @transform_3(%arg0: i32) -> (i32, i32) {
    %c0_i32 = arith.constant 0 : i32
    %c0_i32_0 = arith.constant 0 : i32
    %c0_i32_1 = arith.constant 0 : i32
    return %c0_i32, %c0_i32_0 : i32, i32
  }
  func.func @transform_4(%arg0: i32) -> (i32, i32) {
    %c0_i32 = arith.constant 0 : i32
    %c0_i32_0 = arith.constant 0 : i32
    %c0_i32_1 = arith.constant 0 : i32
    return %c0_i32, %c0_i32_0 : i32, i32
  }
  func.func @transform_5(%arg0: i32) -> (i32, i32) {
    %c0_i32 = arith.constant 0 : i32
    %c0_i32_0 = arith.constant 0 : i32
    return %arg0, %c0_i32 : i32, i32
  }
}

</mosaic_0001>

<llo_original>
// kernel: tpu_custom_call.1
$region0: #{tpu_custom_call.1}
  #allocation0 [shape = 'u32[]', space=smem, size = 0x4, offset = 0x4, fixed_abs, tag = 'smem constant byte address 0x4 - core index']
  #allocation1 [shape = 'u32[144,128]{1,0:T(1,128)}', space=vmem, size = 0x12000, scoped, tag = 'internal scratch']
  %s0 = inlined_call_operand.vmem [shape: f32[8,256], index: 0, kind: input, shape index: {}]
  %s1 = inlined_call_operand.vmem [shape: f32[256,192], index: 1, kind: input, shape index: {}]
  %s2 = inlined_call_operand.vmem [shape: f32[256,192], index: 2, kind: input, shape index: {}]
  %s3 = inlined_call_operand.vmem [shape: f32[192,16], index: 3, kind: input, shape index: {}]
  %s4 = inlined_call_operand.vmem [shape: f32[1,16], index: 4, kind: input, shape index: {}]
  %s5 = inlined_call_operand.hbm [shape: f32[8,16], index: 5, kind: output, shape index: {}]
  %s6 = sld [smem:[#allocation0]]
  $region30: #{tpu_custom_call.1} parent=0
    _
  %s8 = ssub.s32 1, %s6
  %s9 = scalar_select 0, %s8, %s6
  $region1: #{tpu_custom_call.1} parent=0
    #allocation2 [shape = 'u8[4096]{0}', space=vmem, size = 0x1000, scoped, tag = 'output window, operand 0, single buffered']
    #allocation3 [shape = 's32[1]{0}', space=sflag, size = 0x4, scoped, tag = 'scoped memory for tpu_custom_call.1']
    %10 = vsyncpa [#allocation3], 0
    // Predicated region
    $region2: #{tpu_custom_call.1} parent=1 // pred_check
      _
    $region3: #{tpu_custom_call.1} parent=1 // pred_check_branch
      %12 = sbr.rel (0) target = $region5
    $region4: #{tpu_custom_call.1} parent=1 // pred_region
      _
    $region5: #{tpu_custom_call.1} parent=1 // pred_fallthru
      _
    // Predicated region
    $region6: #{tpu_custom_call.1} parent=1 // pred_check
      _
    $region7: #{tpu_custom_call.1} parent=1 // pred_check_branch
      %14 = sbr.rel (0) target = $region9
    $region8: #{tpu_custom_call.1} parent=1 // pred_region
      _
    $region9: #{tpu_custom_call.1} parent=1 // pred_fallthru
      _
    // Predicated region
    $region10: #{tpu_custom_call.1} parent=1 // pred_check
      _
    $region11: #{tpu_custom_call.1} parent=1 // pred_check_branch
      %16 = sbr.rel (0) target = $region13
    $region12: #{tpu_custom_call.1} parent=1 // pred_region
      _
    $region13: #{tpu_custom_call.1} parent=1 // pred_fallthru
      _
    // Predicated region
    $region14: #{tpu_custom_call.1} parent=1 // pred_check
      _
    $region15: #{tpu_custom_call.1} parent=1 // pred_check_branch
      %18 = sbr.rel (0) target = $region17
    $region16: #{tpu_custom_call.1} parent=1 // pred_region
      _
    $region17: #{tpu_custom_call.1} parent=1 // pred_fallthru
      _
    // Predicated region
    $region18: #{tpu_custom_call.1} parent=1 // pred_check
      _
    $region19: #{tpu_custom_call.1} parent=1 // pred_check_branch
      %20 = sbr.rel (0) target = $region21
    $region20: #{tpu_custom_call.1} parent=1 // pred_region
      _
    $region21: #{tpu_custom_call.1} parent=1 // pred_fallthru
      _
    %v21 = vld [vmem:[%s0] sm:$0xff]
    %v22 = vld [vmem:[%s0 + $0x8] sm:$0xff]
    %v23 = vld [vmem:[%s1] sm:$0xff]
    %v24 = vld [vmem:[%s1 + $0x8] sm:$0xff]
    %v25 = vld [vmem:[%s1 + $0x10] sm:$0xff]
    %v26 = vld [vmem:[%s1 + $0x18] sm:$0xff]
    %v27 = vld [vmem:[%s1 + $0x20] sm:$0xff]
    %v28 = vld [vmem:[%s1 + $0x28] sm:$0xff]
    %v29 = vld [vmem:[%s1 + $0x30] sm:$0xff]
    %v30 = vld [vmem:[%s1 + $0x38] sm:$0xff]
    %v31 = vld [vmem:[%s1 + $0x40] sm:$0xff]
    %v32 = vld [vmem:[%s1 + $0x48] sm:$0xff]
    %v33 = vld [vmem:[%s1 + $0x50] sm:$0xff]
    %v34 = vld [vmem:[%s1 + $0x58] sm:$0xff]
    %v35 = vld [vmem:[%s1 + $0x60] sm:$0xff]
    %v36 = vld [vmem:[%s1 + $0x68] sm:$0xff]
    %v37 = vld [vmem:[%s1 + $0x70] sm:$0xff]
    %v38 = vld [vmem:[%s1 + $0x78] sm:$0xff]
    %v39 = vld [vmem:[%s1 + $0x80] sm:$0xff]
    %v40 = vld [vmem:[%s1 + $0x88] sm:$0xff]
    %v41 = vld [vmem:[%s1 + $0x90] sm:$0xff]
    %v42 = vld [vmem:[%s1 + $0x98] sm:$0xff]
    %v43 = vld [vmem:[%s1 + $0xa0] sm:$0xff]
    %v44 = vld [vmem:[%s1 + $0xa8] sm:$0xff]
    %v45 = vld [vmem:[%s1 + $0xb0] sm:$0xff]
    %v46 = vld [vmem:[%s1 + $0xb8] sm:$0xff]
    %v47 = vld [vmem:[%s1 + $0xc0] sm:$0xff]
    %v48 = vld [vmem:[%s1 + $0xc8] sm:$0xff]
    %v49 = vld [vmem:[%s1 + $0xd0] sm:$0xff]
    %v50 = vld [vmem:[%s1 + $0xd8] sm:$0xff]
    %v51 = vld [vmem:[%s1 + $0xe0] sm:$0xff]
    %v52 = vld [vmem:[%s1 + $0xe8] sm:$0xff]
    %v53 = vld [vmem:[%s1 + $0xf0] sm:$0xff]
    %v54 = vld [vmem:[%s1 + $0xf8] sm:$0xff]
    %v55 = vld [vmem:[%s1 + $0x100] sm:$0xff]
    %v56 = vld [vmem:[%s1 + $0x108] sm:$0xff]
    %v57 = vld [vmem:[%s1 + $0x110] sm:$0xff]
    %v58 = vld [vmem:[%s1 + $0x118] sm:$0xff]
    %v59 = vld [vmem:[%s1 + $0x120] sm:$0xff]
    %v60 = vld [vmem:[%s1 + $0x128] sm:$0xff]
    %v61 = vld [vmem:[%s1 + $0x130] sm:$0xff]
    %v62 = vld [vmem:[%s1 + $0x138] sm:$0xff]
    %v63 = vld [vmem:[%s1 + $0x140] sm:$0xff]
    %v64 = vld [vmem:[%s1 + $0x148] sm:$0xff]
    %v65 = vld [vmem:[%s1 + $0x150] sm:$0xff]
    %v66 = vld [vmem:[%s1 + $0x158] sm:$0xff]
    %v67 = vld [vmem:[%s1 + $0x160] sm:$0xff]
    %v68 = vld [vmem:[%s1 + $0x168] sm:$0xff]
    %v69 = vld [vmem:[%s1 + $0x170] sm:$0xff]
    %v70 = vld [vmem:[%s1 + $0x178] sm:$0xff]
    %v71 = vld [vmem:[%s1 + $0x180] sm:$0xff]
    %v72 = vld [vmem:[%s1 + $0x188] sm:$0xff]
    %v73 = vld [vmem:[%s1 + $0x190] sm:$0xff]
    %v74 = vld [vmem:[%s1 + $0x198] sm:$0xff]
    %v75 = vld [vmem:[%s1 + $0x1a0] sm:$0xff]
    %v76 = vld [vmem:[%s1 + $0x1a8] sm:$0xff]
    %v77 = vld [vmem:[%s1 + $0x1b0] sm:$0xff]
    %v78 = vld [vmem:[%s1 + $0x1b8] sm:$0xff]
    %v79 = vld [vmem:[%s1 + $0x1c0] sm:$0xff]
    %v80 = vld [vmem:[%s1 + $0x1c8] sm:$0xff]
    %v81 = vld [vmem:[%s1 + $0x1d0] sm:$0xff]
    %v82 = vld [vmem:[%s1 + $0x1d8] sm:$0xff]
    %v83 = vld [vmem:[%s1 + $0x1e0] sm:$0xff]
    %v84 = vld [vmem:[%s1 + $0x1e8] sm:$0xff]
    %v85 = vld [vmem:[%s1 + $0x1f0] sm:$0xff]
    %v86 = vld [vmem:[%s1 + $0x1f8] sm:$0xff]
    %87 = vmatprep.subr.mxu0 %v54
    %88 = vmatpush1.msra.mxu0 %v53
    %89 = vmatprep.subr.mxu0 %v52
    %90 = vmatpush1.msra.mxu0 %v51
    %91 = vmatprep.subr.mxu0 %v50
    %92 = vmatpush1.msra.mxu0 %v49
    %93 = vmatprep.subr.mxu0 %v48
    %94 = vmatpush1.msra.mxu0 %v47
    %95 = vmatprep.subr.mxu0 %v46
    %96 = vmatpush1.msra.mxu0 %v45
    %97 = vmatprep.subr.mxu0 %v44
    %98 = vmatpush1.msra.mxu0 %v43
    %99 = vmatprep.subr.mxu0 %v42
    %100 = vmatpush1.msra.mxu0 %v41
    %101 = vmatprep.subr.mxu0 %v40
    %102 = vmatpush1.msra.mxu0 %v39
    %103 = vmatprep.subr.mxu0 %v38
    %104 = vmatpush1.msra.mxu0 %v37
    %105 = vmatprep.subr.mxu0 %v36
    %106 = vmatpush1.msra.mxu0 %v35
    %107 = vmatprep.subr.mxu0 %v34
    %108 = vmatpush1.msra.mxu0 %v33
    %109 = vmatprep.subr.mxu0 %v32
    %110 = vmatpush1.msra.mxu0 %v31
    %111 = vmatprep.subr.mxu0 %v30
    %112 = vmatpush1.msra.mxu0 %v29
    %113 = vmatprep.subr.mxu0 %v28
    %114 = vmatpush1.msra.mxu0 %v27
    %115 = vmatprep.subr.mxu0 %v26
    %116 = vmatpush1.msra.mxu0 %v25
    %117 = vmatprep.subr.mxu0 %v24
    %118 = vmatpush1.msra.mxu0 %v23
    %119 = vmatprep.subr.mxu0 %v86
    %120 = vmatpush2.msra.mxu0 %v85
    %121 = vmatprep.subr.mxu0 %v84
    %122 = vmatpush2.msra.mxu0 %v83
    %123 = vmatprep.subr.mxu0 %v82
    %124 = vmatpush2.msra.mxu0 %v81
    %125 = vmatprep.subr.mxu0 %v80
    %126 = vmatpush2.msra.mxu0 %v79
    %127 = vmatprep.subr.mxu0 %v78
    %128 = vmatpush2.msra.mxu0 %v77
    %129 = vmatprep.subr.mxu0 %v76
    %130 = vmatpush2.msra.mxu0 %v75
    %131 = vmatprep.subr.mxu0 %v74
    %132 = vmatpush2.msra.mxu0 %v73
    %133 = vmatprep.subr.mxu0 %v72
    %134 = vmatpush2.msra.mxu0 %v71
    %135 = vmatprep.subr.mxu0 %v70
    %136 = vmatpush2.msra.mxu0 %v69
    %137 = vmatprep.subr.mxu0 %v68
    %138 = vmatpush2.msra.mxu0 %v67
    %139 = vmatprep.subr.mxu0 %v66
    %140 = vmatpush2.msra.mxu0 %v65
    %141 = vmatprep.subr.mxu0 %v64
    %142 = vmatpush2.msra.mxu0 %v63
    %143 = vmatprep.subr.mxu0 %v62
    %144 = vmatpush2.msra.mxu0 %v61
    %145 = vmatprep.subr.mxu0 %v60
    %146 = vmatpush2.msra.mxu0 %v59
    %147 = vmatprep.subr.mxu0 %v58
    %148 = vmatpush2.msra.mxu0 %v57
    %149 = vmatprep.subr.mxu0 %v56
    %150 = vmatpush2.msra.mxu0 %v55
    %151 = vmatprep.mubr.f32.mxu0 %v22
    %152 = vmatmul.mubr.f32.gmra.mxu0 %v21
    %v153 = vpop.f32.mrf.mxu0
    %v154 = vadd.f32 0.0, %v153
    %v155 = vpop.f32.mrf.mxu0
    %v156 = vadd.f32 0.0, %v155
    %157 = vdwg.mxu0
    %v158 = vld [vmem:[%s2] sm:$0xff]
    %v159 = vld [vmem:[%s2 + $0x8] sm:$0xff]
    %v160 = vld [vmem:[%s2 + $0x10] sm:$0xff]
    %v161 = vld [vmem:[%s2 + $0x18] sm:$0xff]
    %v162 = vld [vmem:[%s2 + $0x20] sm:$0xff]
    %v163 = vld [vmem:[%s2 + $0x28] sm:$0xff]
    %v164 = vld [vmem:[%s2 + $0x30] sm:$0xff]
    %v165 = vld [vmem:[%s2 + $0x38] sm:$0xff]
    %v166 = vld [vmem:[%s2 + $0x40] sm:$0xff]
    %v167 = vld [vmem:[%s2 + $0x48] sm:$0xff]
    %v168 = vld [vmem:[%s2 + $0x50] sm:$0xff]
    %v169 = vld [vmem:[%s2 + $0x58] sm:$0xff]
    %v170 = vld [vmem:[%s2 + $0x60] sm:$0xff]
    %v171 = vld [vmem:[%s2 + $0x68] sm:$0xff]
    %v172 = vld [vmem:[%s2 + $0x70] sm:$0xff]
    %v173 = vld [vmem:[%s2 + $0x78] sm:$0xff]
    %v174 = vld [vmem:[%s2 + $0x80] sm:$0xff]
    %v175 = vld [vmem:[%s2 + $0x88] sm:$0xff]
    %v176 = vld [vmem:[%s2 + $0x90] sm:$0xff]
    %v177 = vld [vmem:[%s2 + $0x98] sm:$0xff]
    %v178 = vld [vmem:[%s2 + $0xa0] sm:$0xff]
    %v179 = vld [vmem:[%s2 + $0xa8] sm:$0xff]
    %v180 = vld [vmem:[%s2 + $0xb0] sm:$0xff]
    %v181 = vld [vmem:[%s2 + $0xb8] sm:$0xff]
    %v182 = vld [vmem:[%s2 + $0xc0] sm:$0xff]
    %v183 = vld [vmem:[%s2 + $0xc8] sm:$0xff]
    %v184 = vld [vmem:[%s2 + $0xd0] sm:$0xff]
    %v185 = vld [vmem:[%s2 + $0xd8] sm:$0xff]
    %v186 = vld [vmem:[%s2 + $0xe0] sm:$0xff]
    %v187 = vld [vmem:[%s2 + $0xe8] sm:$0xff]
    %v188 = vld [vmem:[%s2 + $0xf0] sm:$0xff]
    %v189 = vld [vmem:[%s2 + $0xf8] sm:$0xff]
    %v190 = vld [vmem:[%s2 + $0x100] sm:$0xff]
    %v191 = vld [vmem:[%s2 + $0x108] sm:$0xff]
    %v192 = vld [vmem:[%s2 + $0x110] sm:$0xff]
    %v193 = vld [vmem:[%s2 + $0x118] sm:$0xff]
    %v194 = vld [vmem:[%s2 + $0x120] sm:$0xff]
    %v195 = vld [vmem:[%s2 + $0x128] sm:$0xff]
    %v196 = vld [vmem:[%s2 + $0x130] sm:$0xff]
    %v197 = vld [vmem:[%s2 + $0x138] sm:$0xff]
    %v198 = vld [vmem:[%s2 + $0x140] sm:$0xff]
    %v199 = vld [vmem:[%s2 + $0x148] sm:$0xff]
    %v200 = vld [vmem:[%s2 + $0x150] sm:$0xff]
    %v201 = vld [vmem:[%s2 + $0x158] sm:$0xff]
    %v202 = vld [vmem:[%s2 + $0x160] sm:$0xff]
    %v203 = vld [vmem:[%s2 + $0x168] sm:$0xff]
    %v204 = vld [vmem:[%s2 + $0x170] sm:$0xff]
    %v205 = vld [vmem:[%s2 + $0x178] sm:$0xff]
    %v206 = vld [vmem:[%s2 + $0x180] sm:$0xff]
    %v207 = vld [vmem:[%s2 + $0x188] sm:$0xff]
    %v208 = vld [vmem:[%s2 + $0x190] sm:$0xff]
    %v209 = vld [vmem:[%s2 + $0x198] sm:$0xff]
    %v210 = vld [vmem:[%s2 + $0x1a0] sm:$0xff]
    %v211 = vld [vmem:[%s2 + $0x1a8] sm:$0xff]
    %v212 = vld [vmem:[%s2 + $0x1b0] sm:$0xff]
    %v213 = vld [vmem:[%s2 + $0x1b8] sm:$0xff]
    %v214 = vld [vmem:[%s2 + $0x1c0] sm:$0xff]
    %v215 = vld [vmem:[%s2 + $0x1c8] sm:$0xff]
    %v216 = vld [vmem:[%s2 + $0x1d0] sm:$0xff]
    %v217 = vld [vmem:[%s2 + $0x1d8] sm:$0xff]
    %v218 = vld [vmem:[%s2 + $0x1e0] sm:$0xff]
    %v219 = vld [vmem:[%s2 + $0x1e8] sm:$0xff]
    %v220 = vld [vmem:[%s2 + $0x1f0] sm:$0xff]
    %v221 = vld [vmem:[%s2 + $0x1f8] sm:$0xff]
    %222 = vmatprep.subr.mxu0 %v189
    %223 = vmatpush1.msra.mxu0 %v188
    %224 = vmatprep.subr.mxu0 %v187
    %225 = vmatpush1.msra.mxu0 %v186
    %226 = vmatprep.subr.mxu0 %v185
    %227 = vmatpush1.msra.mxu0 %v184
    %228 = vmatprep.subr.mxu0 %v183
    %229 = vmatpush1.msra.mxu0 %v182
    %230 = vmatprep.subr.mxu0 %v181
    %231 = vmatpush1.msra.mxu0 %v180
    %232 = vmatprep.subr.mxu0 %v179
    %233 = vmatpush1.msra.mxu0 %v178
    %234 = vmatprep.subr.mxu0 %v177
    %235 = vmatpush1.msra.mxu0 %v176
    %236 = vmatprep.subr.mxu0 %v175
    %237 = vmatpush1.msra.mxu0 %v174
    %238 = vmatprep.subr.mxu0 %v173
    %239 = vmatpush1.msra.mxu0 %v172
    %240 = vmatprep.subr.mxu0 %v171
    %241 = vmatpush1.msra.mxu0 %v170
    %242 = vmatprep.subr.mxu0 %v169
    %243 = vmatpush1.msra.mxu0 %v168
    %244 = vmatprep.subr.mxu0 %v167
    %245 = vmatpush1.msra.mxu0 %v166
    %246 = vmatprep.subr.mxu0 %v165
    %247 = vmatpush1.msra.mxu0 %v164
    %248 = vmatprep.subr.mxu0 %v163
    %249 = vmatpush1.msra.mxu0 %v162
    %250 = vmatprep.subr.mxu0 %v161
    %251 = vmatpush1.msra.mxu0 %v160
    %252 = vmatprep.subr.mxu0 %v159
    %253 = vmatpush1.msra.mxu0 %v158
    %254 = vmatprep.subr.mxu0 %v221
    %255 = vmatpush2.msra.mxu0 %v220
    %256 = vmatprep.subr.mxu0 %v219
    %257 = vmatpush2.msra.mxu0 %v218
    %258 = vmatprep.subr.mxu0 %v217
    %259 = vmatpush2.msra.mxu0 %v216
    %260 = vmatprep.subr.mxu0 %v215
    %261 = vmatpush2.msra.mxu0 %v214
    %262 = vmatprep.subr.mxu0 %v213
    %263 = vmatpush2.msra.mxu0 %v212
    %264 = vmatprep.subr.mxu0 %v211
    %265 = vmatpush2.msra.mxu0 %v210
    %266 = vmatprep.subr.mxu0 %v209
    %267 = vmatpush2.msra.mxu0 %v208
    %268 = vmatprep.subr.mxu0 %v207
    %269 = vmatpush2.msra.mxu0 %v206
    %270 = vmatprep.subr.mxu0 %v205
    %271 = vmatpush2.msra.mxu0 %v204
    %272 = vmatprep.subr.mxu0 %v203
    %273 = vmatpush2.msra.mxu0 %v202
    %274 = vmatprep.subr.mxu0 %v201
    %275 = vmatpush2.msra.mxu0 %v200
    %276 = vmatprep.subr.mxu0 %v199
    %277 = vmatpush2.msra.mxu0 %v198
    %278 = vmatprep.subr.mxu0 %v197
    %279 = vmatpush2.msra.mxu0 %v196
    %280 = vmatprep.subr.mxu0 %v195
    %281 = vmatpush2.msra.mxu0 %v194
    %282 = vmatprep.subr.mxu0 %v193
    %283 = vmatpush2.msra.mxu0 %v192
    %284 = vmatprep.subr.mxu0 %v191
    %285 = vmatpush2.msra.mxu0 %v190
    %286 = vmatprep.mubr.f32.mxu0 %v22
    %287 = vmatmul.mubr.f32.gmra.mxu0 %v21
    %v288 = vpop.f32.mrf.mxu0
    %v289 = vadd.f32 0.0, %v288
    %v290 = vpop.f32.mrf.mxu0
    %v291 = vadd.f32 0.0, %v290
    %292 = vdwg.mxu0
    %v293 = vmul.f32 %v154, %v154
    %v294 = vmul.f32 %v156, %v156
    %v295 = vmul.f32 %v289, %v289
    %v296 = vmul.f32 %v291, %v291
    %v297 = vadd.f32 %v293, %v295
    %v298 = vadd.f32 %v294, %v296
    %v299 = vrsqrt.pop %v297
    %v300 = vmul.f32 %v297, %v299
    %vm301 = vcmp.eq.f32.partialorder %v297, inf
    %v302 = vsel %vm301, %v297, %v300
    %vm303 = vcmp.eq.f32.partialorder %v297, 0.0
    %v304 = vand.u32 %v297, 2147483648
    %v305 = vsel %vm303, %v304, %v302
    %v306 = vrsqrt.pop %v298
    %v307 = vmul.f32 %v298, %v306
    %vm308 = vcmp.eq.f32.partialorder %v298, inf
    %v309 = vsel %vm308, %v298, %v307
    %vm310 = vcmp.eq.f32.partialorder %v298, 0.0
    %v311 = vand.u32 %v298, 2147483648
    %v312 = vsel %vm310, %v311, %v309
    %v313 = vld [vmem:[%s3] sm:$0xff]
    %v314 = vld [vmem:[%s3 + $0x8] sm:$0xff]
    %v315 = vld [vmem:[%s3 + $0x10] sm:$0xff]
    %v316 = vld [vmem:[%s3 + $0x18] sm:$0xff]
    %v317 = vld [vmem:[%s3 + $0x20] sm:$0xff]
    %v318 = vld [vmem:[%s3 + $0x28] sm:$0xff]
    %v319 = vld [vmem:[%s3 + $0x30] sm:$0xff]
    %v320 = vld [vmem:[%s3 + $0x38] sm:$0xff]
    %v321 = vld [vmem:[%s3 + $0x40] sm:$0xff]
    %v322 = vld [vmem:[%s3 + $0x48] sm:$0xff]
    %v323 = vld [vmem:[%s3 + $0x50] sm:$0xff]
    %v324 = vld [vmem:[%s3 + $0x58] sm:$0xff]
    %v325 = vld [vmem:[%s3 + $0x60] sm:$0xff]
    %v326 = vld [vmem:[%s3 + $0x68] sm:$0xff]
    %v327 = vld [vmem:[%s3 + $0x70] sm:$0xff]
    %v328 = vld [vmem:[%s3 + $0x78] sm:$0xff]
    %v329 = vld [vmem:[%s3 + $0x80] sm:$0xff]
    %v330 = vld [vmem:[%s3 + $0x88] sm:$0xff]
    %v331 = vld [vmem:[%s3 + $0x90] sm:$0xff]
    %v332 = vld [vmem:[%s3 + $0x98] sm:$0xff]
    %v333 = vld [vmem:[%s3 + $0xa0] sm:$0xff]
    %v334 = vld [vmem:[%s3 + $0xa8] sm:$0xff]
    %v335 = vld [vmem:[%s3 + $0xb0] sm:$0xff]
    %v336 = vld [vmem:[%s3 + $0xb8] sm:$0xff]
    %v337 = vld [vmem:[%s4] sm:$0x1]
    %v339 = vlaneseq
    %v340 = vshrl.u32 %v339, 7
    %v341 = vsub.s32 0, %v340
    %v342 = vrot.slane %v337, %v341
    %vm344 = vcmask 523264
    %v346 = vsel %vm344, %v312, 0
    %348 = vmatprep.subr.mxu0 0.0
    %349 = vmatpush1.msra.mxu0 %v328
    %350 = vmatprep.subr.mxu0 0.0
    %351 = vmatpush1.msra.mxu0 %v327
    %352 = vmatprep.subr.mxu0 0.0
    %353 = vmatpush1.msra.mxu0 %v326
    %354 = vmatprep.subr.mxu0 0.0
    %355 = vmatpush1.msra.mxu0 %v325
    %356 = vmatprep.subr.mxu0 0.0
    %357 = vmatpush1.msra.mxu0 %v324
    %358 = vmatprep.subr.mxu0 0.0
    %359 = vmatpush1.msra.mxu0 %v323
    %360 = vmatprep.subr.mxu0 0.0
    %361 = vmatpush1.msra.mxu0 %v322
    %362 = vmatprep.subr.mxu0 0.0
    %363 = vmatpush1.msra.mxu0 %v321
    %364 = vmatprep.subr.mxu0 0.0
    %365 = vmatpush1.msra.mxu0 %v320
    %366 = vmatprep.subr.mxu0 0.0
    %367 = vmatpush1.msra.mxu0 %v319
    %368 = vmatprep.subr.mxu0 0.0
    %369 = vmatpush1.msra.mxu0 %v318
    %370 = vmatprep.subr.mxu0 0.0
    %371 = vmatpush1.msra.mxu0 %v317
    %372 = vmatprep.subr.mxu0 0.0
    %373 = vmatpush1.msra.mxu0 %v316
    %374 = vmatprep.subr.mxu0 0.0
    %375 = vmatpush1.msra.mxu0 %v315
    %376 = vmatprep.subr.mxu0 0.0
    %377 = vmatpush1.msra.mxu0 %v314
    %378 = vmatprep.subr.mxu0 0.0
    %379 = vmatpush1.msra.mxu0 %v313
    %380 = vmatprep.subr.mxu0 0.0
    %381 = vmatpush2.msra.mxu0 0.0
    %382 = vmatprep.subr.mxu0 0.0
    %383 = vmatpush2.msra.mxu0 0.0
    %384 = vmatprep.subr.mxu0 0.0
    %385 = vmatpush2.msra.mxu0 0.0
    %386 = vmatprep.subr.mxu0 0.0
    %387 = vmatpush2.msra.mxu0 0.0
    %388 = vmatprep.subr.mxu0 0.0
    %389 = vmatpush2.msra.mxu0 0.0
    %390 = vmatprep.subr.mxu0 0.0
    %391 = vmatpush2.msra.mxu0 0.0
    %392 = vmatprep.subr.mxu0 0.0
    %393 = vmatpush2.msra.mxu0 0.0
    %394 = vmatprep.subr.mxu0 0.0
    %395 = vmatpush2.msra.mxu0 0.0
    %396 = vmatprep.subr.mxu0 0.0
    %397 = vmatpush2.msra.mxu0 %v336
    %398 = vmatprep.subr.mxu0 0.0
    %399 = vmatpush2.msra.mxu0 %v335
    %400 = vmatprep.subr.mxu0 0.0
    %401 = vmatpush2.msra.mxu0 %v334
    %402 = vmatprep.subr.mxu0 0.0
    %403 = vmatpush2.msra.mxu0 %v333
    %404 = vmatprep.subr.mxu0 0.0
    %405 = vmatpush2.msra.mxu0 %v332
    %406 = vmatprep.subr.mxu0 0.0
    %407 = vmatpush2.msra.mxu0 %v331
    %408 = vmatprep.subr.mxu0 0.0
    %409 = vmatpush2.msra.mxu0 %v330
    %410 = vmatprep.subr.mxu0 0.0
    %411 = vmatpush2.msra.mxu0 %v329
    %412 = vmatprep.mubr.f32.mxu0 %v346
    %413 = vmatmul.mubr.f32.gmra.mxu0 %v305
    %v414 = vpop.f32.mrf.mxu0
    %v415 = vadd.f32 %v342, %v414
    %v416 = vpop.f32.mrf.mxu0
    %417 = vdwg.mxu0
    %vm418 = vcmp.ge.f32.partialorder %v415, 0.0
    %v419 = vmul.f32 %v415, 0.02
    %v420 = vsel %vm418, %v415, %v419
    %vm421 = vcmask 130048
    %422 = vst.msk [vmem:[#allocation2] sm:$0xff] %vm421, %v420
    // Predicated region
    $region22: #{tpu_custom_call.1} parent=1 // pred_check
      _
    $region23: #{tpu_custom_call.1} parent=1 // pred_check_branch
      %424 = sbr.rel (0) target = $region25
    $region24: #{tpu_custom_call.1} parent=1 // pred_region
      %s426 = ssub.s32 128, 128
      %427 = vsyncadd [#allocation3], %s426
      %s429 = sshll.u32 [#allocation2], 4
      %s430 = int_to_ptr.vmem [resolvable:$true] %s429
      %432 = dma.vmem_to_hbm [thread:$0]  %s430, 128, %s5, [#allocation3]
    $region25: #{tpu_custom_call.1} parent=1 // pred_fallthru
      _
    // Predicated region
    $region26: #{tpu_custom_call.1} parent=1 // pred_check
      _
    $region27: #{tpu_custom_call.1} parent=1 // pred_check_branch
      %434 = sbr.rel (0) target = $region29
    $region28: #{tpu_custom_call.1} parent=1 // pred_region
      %435 = dma.done [#allocation3], 128
    $region29: #{tpu_custom_call.1} parent=1 // pred_fallthru
      _
    %436 = vsyncpa [#allocation3], 1

</llo_original>
